<compile_context>
chip_gen: v6e
topology: v6e:2x2x1
jax: 0.10.0
libtpu: 0.0.40
codegen_flags: <defaults>
</compile_context>

<pallas_src>
import functools

import jax
import jax.numpy as jnp
from jax.experimental import pallas as pl
from jax.experimental.pallas import tpu as pltpu


# --------------------------------------------------------------------------- #
# Fused kernel: all layers + mean-over-seq for one batch tile, one pallas_call
# --------------------------------------------------------------------------- #
def fused_mca_kernel(
    x_ref,                       # (TB, S, D) f32 input block (read on layer 0)
    wqkv_ref, bqkv_ref,          # (1, D, 3D) bf16 / (1, 1, 3D) f32
    wo_ref, bo_ref,              # (1, D, D)  bf16 / (1, 1, D)  f32
    gamma_ref, beta_ref,         # (1, 1, D) f32 layernorm params
    fused_ref,                   # (TB, D) f32 output (written on last layer)
    attn_ref,                    # (1, TB, S*S) f32 per-layer attention output
    feat_ref,                    # VMEM scratch (TB, S, D) f32, resident over layers
    *, eps=1e-5,
):
  layer = pl.program_id(1)
  num_layers = pl.num_programs(1)
  TB, S, D = feat_ref.shape

  # Load this batch tile's activations into the resident buffer on layer 0.
  @pl.when(layer == 0)
  def _():
    feat_ref[...] = x_ref[...]

  x2 = feat_ref[...].reshape(TB * S, D)          # f32 residual stream

  # ---- fused QKV projection: one bf16 MXU matmul, f32 accumulation -------- #
  x2_bf = x2.astype(jnp.bfloat16)
  qkv = jnp.dot(x2_bf, wqkv_ref[0],
                preferred_element_type=jnp.float32) + bqkv_ref[0]   # (TB*S, 3D)
  q = qkv[:, :D].reshape(TB, S, D)               # scale already folded into wq/bq
  k = qkv[:, D:2 * D].reshape(TB, S, D)
  v = qkv[:, 2 * D:].reshape(TB, S, D)

  # ---- scaled dot-product attention (scale folded into q) ----------------- #
  scores = jnp.einsum("bsd,btd->bst",
                      q.astype(jnp.bfloat16), k.astype(jnp.bfloat16),
                      preferred_element_type=jnp.float32)           # (TB, S, S)
  scores = scores - jnp.max(scores, axis=-1, keepdims=True)
  e = jnp.exp(scores)                                               # f32 EUP
  denom = jnp.sum(e, axis=-1, keepdims=True)
  # EUP approx reciprocal + one Newton step -> ~f32 accuracy, frees VALU slots.
  r = pl.reciprocal(denom, approx=True)
  r = r * (2.0 - denom * r)
  attn = e * r                                                      # (TB, S, S)

  attended = jnp.einsum("bst,btd->bsd",
                        attn.astype(jnp.bfloat16), v.astype(jnp.bfloat16),
                        preferred_element_type=jnp.float32)         # (TB, S, D)

  o2 = jnp.dot(attended.reshape(TB * S, D).astype(jnp.bfloat16), wo_ref[0],
               preferred_element_type=jnp.float32) + bo_ref[0]      # (TB*S, D)

  # ---- residual + LayerNorm over d_model (biased variance, torch) --------- #
  res = x2 + o2
  mean = jnp.mean(res, axis=-1, keepdims=True)
  cent = res - mean
  var = jnp.mean(cent * cent, axis=-1, keepdims=True)
  normed = cent * jax.lax.rsqrt(var + eps)
  out2 = normed * gamma_ref[0] + beta_ref[0]                        # (TB*S, D)

  # Lane-dense per-layer attention writeback (last dim S*S, unmasked stores).
  attn_ref[0] = attn.reshape(TB, S * S).astype(attn_ref.dtype)

  # Carry activations to the next layer (stays in VMEM; skip on the last one).
  @pl.when(layer < num_layers - 1)
  def _():
    feat_ref[...] = out2.reshape(TB, S, D)

  # Final fused features: mean over the sequence axis, written on the last
  # layer (output block index only changes with the batch tile, so this write
  # lands before writeback).
  @pl.when(layer == num_layers - 1)
  def _():
    fused_ref[...] = jnp.mean(out2.reshape(TB, S, D), axis=1).astype(fused_ref.dtype)


# --------------------------------------------------------------------------- #
# One-time parameter preparation (hoisted out of the forward pass)
# --------------------------------------------------------------------------- #
def prepare_params(layer_params, d_model):
  """Stack per-layer torch-style params into (L, ...) arrays.

  torch Linear computes y = x @ W.T + b, so weights are pre-transposed to
  (in, out).  The attention 1/sqrt(d_model) scale is folded into wq / bq,
  wq|wk|wv are fused into a single (D, 3D) matrix, and matmul weights are
  stored in bf16 (activation-side inputs are cast in-kernel, f32 accumulate).
  """
  inv_sqrt_d = 1.0 / float(d_model) ** 0.5
  wq = jnp.stack([p["wq"].T for p in layer_params]) * inv_sqrt_d     # (L, D, D)
  wk = jnp.stack([p["wk"].T for p in layer_params])
  wv = jnp.stack([p["wv"].T for p in layer_params])
  wqkv = jnp.concatenate([wq, wk, wv], axis=-1).astype(jnp.bfloat16)  # (L, D, 3D)

  bq = jnp.stack([p["bq"] for p in layer_params]) * inv_sqrt_d        # (L, D)
  bk = jnp.stack([p["bk"] for p in layer_params])
  bv = jnp.stack([p["bv"] for p in layer_params])
  bqkv = jnp.concatenate([bq, bk, bv], axis=-1)[:, None, :]           # (L, 1, 3D) f32

  wo = jnp.stack([p["wo"].T for p in layer_params]).astype(jnp.bfloat16)   # (L, D, D)
  bo = jnp.stack([p["bo"] for p in layer_params])[:, None, :]              # (L, 1, D)
  gamma = jnp.stack([p["gamma"] for p in layer_params])[:, None, :]
  beta = jnp.stack([p["beta"] for p in layer_params])[:, None, :]
  return {"wqkv": wqkv, "bqkv": bqkv, "wo": wo, "bo": bo,
          "gamma": gamma, "beta": beta}


# --------------------------------------------------------------------------- #
# Wrapper: single pallas_call for the whole module
# --------------------------------------------------------------------------- #
def multi_cross_attention(features, prep, *, batch_tile=None, eps=1e-5):
  """features: (B, S, D) float32.  prep: output of prepare_params.

  Returns (fused_features (B, D), [attn_weights (B, S, S)] * L).
  """
  B, S, D = features.shape
  L = prep["wqkv"].shape[0]
  S2 = S * S

  # Batch tile: multiple of 8 when possible (megacore-parallel axis + valid
  # sublane block shapes); otherwise a single full-batch tile.
  if batch_tile is None:
    batch_tile = 8 if (B % 8 == 0) else B
  assert B % batch_tile == 0, "batch_tile must divide B"
  TB = batch_tile
  nb = B // TB

  mat_qkv_spec = pl.BlockSpec((1, D, 3 * D), lambda b, l: (l, 0, 0))
  vec_qkv_spec = pl.BlockSpec((1, 1, 3 * D), lambda b, l: (l, 0, 0))
  mat_spec = pl.BlockSpec((1, D, D), lambda b, l: (l, 0, 0))
  vec_spec = pl.BlockSpec((1, 1, D), lambda b, l: (l, 0, 0))

  fused, attn_stack = pl.pallas_call(
      functools.partial(fused_mca_kernel, eps=eps),
      out_shape=(
          jax.ShapeDtypeStruct((B, D), jnp.float32),
          jax.ShapeDtypeStruct((L, B, S2), jnp.float32),   # lane-dense attn
      ),
      grid=(nb, L),
      in_specs=[
          pl.BlockSpec((TB, S, D), lambda b, l: (b, 0, 0)),  # input features
          mat_qkv_spec, vec_qkv_spec,                        # fused QKV (bf16 / f32)
          mat_spec, vec_spec,                                # output layer
          vec_spec, vec_spec,                                # layernorm gamma/beta
      ],
      out_specs=(
          pl.BlockSpec((TB, D), lambda b, l: (b, 0)),        # fused per batch tile
          pl.BlockSpec((1, TB, S2), lambda b, l: (l, b, 0)),
      ),
      scratch_shapes=[pltpu.VMEM((TB, S, D), jnp.float32)],
      compiler_params=pltpu.CompilerParams(
          dimension_semantics=("parallel", "arbitrary"),
          vmem_limit_bytes=64 * 1024 * 1024),
  )(features, prep["wqkv"], prep["bqkv"], prep["wo"], prep["bo"],
    prep["gamma"], prep["beta"])

  # Metadata-only reshape back to per-layer (B, S, S) attention maps.
  attn_list = [attn_stack[i].reshape(B, S, S) for i in range(L)]
  return fused, attn_list


# --------------------------------------------------------------------------- #
# Deterministic parameter init + pure-JAX reference for verification
# --------------------------------------------------------------------------- #
def init_layer_params(key, d_model):
  ks = jax.random.split(key, 8)
  scale = 0.1
  return {
      "wq": scale * jax.random.normal(ks[0], (d_model, d_model), jnp.float32),
      "bq": scale * jax.random.normal(ks[1], (d_model,), jnp.float32),
      "wk": scale * jax.random.normal(ks[2], (d_model, d_model), jnp.float32),
      "bk": scale * jax.random.normal(ks[3], (d_model,), jnp.float32),
      "wv": scale * jax.random.normal(ks[4], (d_model, d_model), jnp.float32),
      "bv": scale * jax.random.normal(ks[5], (d_model,), jnp.float32),
      "wo": scale * jax.random.normal(ks[6], (d_model, d_model), jnp.float32),
      "bo": scale * jax.random.normal(ks[7], (d_model,), jnp.float32),
      "gamma": jnp.ones((d_model,), jnp.float32),
      "beta": jnp.zeros((d_model,), jnp.float32),
  }


def reference_forward(features, layer_params):
  attns = []
  for p in layer_params:
    x = features
    q = x @ p["wq"].T + p["bq"]
    k = x @ p["wk"].T + p["bk"]
    v = x @ p["wv"].T + p["bv"]
    scores = jnp.einsum("bsd,btd->bst", q, k) / jnp.sqrt(jnp.float32(x.shape[-1]))
    attn = jax.nn.softmax(scores, axis=-1)
    attended = jnp.einsum("bst,btd->bsd", attn, v)
    o = attended @ p["wo"].T + p["bo"]
    r = x + o
    mean = r.mean(-1, keepdims=True)
    var = ((r - mean) ** 2).mean(-1, keepdims=True)
    features = (r - mean) / jnp.sqrt(var + 1e-5) * p["gamma"] + p["beta"]
    attns.append(attn)
  return features.mean(axis=1), attns


# --------------------------------------------------------------------------- #
if __name__ == "__main__":
  B, S, D = 2, 8, 32           # batch, sequence, d_model
  num_layers = 2

  key = jax.random.PRNGKey(0)
  k_x, *k_layers = jax.random.split(key, 1 + num_layers)
  features = jax.random.normal(k_x, (B, S, D), jnp.float32)
  layer_params = [init_layer_params(k, D) for k in k_layers]

  # One-time parameter preparation (transposes, QKV fusion, scale fold, bf16 cast).
  prep = prepare_params(layer_params, D)

  fused, attn_list = multi_cross_attention(features, prep)
  fused = jax.block_until_ready(fused)
  attn_list = [jax.block_until_ready(a) for a in attn_list]

  # Sanity check against a pure-JAX f32 reference (bf16 MXU -> looser tolerance).
  fused_ref, attn_ref = reference_forward(features, layer_params)
  assert fused.shape == (B, D)
  assert all(a.shape == (B, S, S) for a in attn_list)
  assert jnp.allclose(fused, fused_ref, atol=2e-2, rtol=2e-2)
  for a, ar in zip(attn_list, attn_ref):
    assert jnp.allclose(a, ar, atol=2e-2, rtol=2e-2)

  print("KERNEL_OK")
</pallas_src>

<mosaic_0001>
module attributes {stable_mosaic.version = 11 : i64} {
  func.func @fused_mca_kernel(%arg0: i32, %arg1: i32, %arg2: memref<2x8x32xf32, #tpu.memory_space<vmem>>, %arg3: memref<1x32x96xbf16, #tpu.memory_space<vmem>>, %arg4: memref<1x1x96xf32, #tpu.memory_space<vmem>>, %arg5: memref<1x32x32xbf16, #tpu.memory_space<vmem>>, %arg6: memref<1x1x32xf32, #tpu.memory_space<vmem>>, %arg7: memref<1x1x32xf32, #tpu.memory_space<vmem>>, %arg8: memref<1x1x32xf32, #tpu.memory_space<vmem>>, %arg9: memref<2x32xf32, #tpu.memory_space<vmem>>, %arg10: memref<1x2x64xf32, #tpu.memory_space<vmem>>, %arg11: memref<2x8x32xf32, #tpu.memory_space<vmem>>) attributes {dimension_semantics = [#tpu.dimension_semantics<parallel>, #tpu.dimension_semantics<arbitrary>], iteration_bounds = array<i64: 1, 2>, scalar_prefetch = 0 : i64, scratch_operands = 1 : i64, tpu.core_type = #tpu.core_type<tc>, window_params = [{transform_indices = @transform_0, window_bounds = array<i64: 2, 8, 32>}, {transform_indices = @transform_1, window_bounds = array<i64: 1, 32, 96>}, {transform_indices = @transform_2, window_bounds = array<i64: 1, 1, 96>}, {transform_indices = @transform_3, window_bounds = array<i64: 1, 32, 32>}, {transform_indices = @transform_4, window_bounds = array<i64: 1, 1, 32>}, {transform_indices = @transform_5, window_bounds = array<i64: 1, 1, 32>}, {transform_indices = @transform_6, window_bounds = array<i64: 1, 1, 32>}, {transform_indices = @transform_7, window_bounds = array<i64: 2, 32>}, {transform_indices = @transform_8, window_bounds = array<i64: 1, 2, 64>}]} {
    %c0_i32 = arith.constant 0 : i32
    %0 = arith.cmpi eq, %arg1, %c0_i32 : i32
    %1 = arith.extui %0 : i1 to i32
    %c0_i32_0 = arith.constant 0 : i32
    %2 = arith.cmpi ne, %1, %c0_i32_0 : i32
    scf.if %2 {
      %c0_38 = arith.constant 0 : index
      %c0_39 = arith.constant 0 : index
      %c0_40 = arith.constant 0 : index
      %83 = vector.load %arg2[%c0_38, %c0_39, %c0_40] : memref<2x8x32xf32, #tpu.memory_space<vmem>>, vector<2x8x32xf32>
      %c0_41 = arith.constant 0 : index
      %c0_42 = arith.constant 0 : index
      %c0_43 = arith.constant 0 : index
      %84 = vector.load %arg11[%c0_41, %c0_42, %c0_43] : memref<2x8x32xf32, #tpu.memory_space<vmem>>, vector<2x8x32xf32>
      tpu.vector_store %arg11[%c0_41, %c0_42, %c0_43], %83 {strides = array<i32>} : memref<2x8x32xf32, #tpu.memory_space<vmem>>, vector<2x8x32xf32>,
    } else {
    }
    %c0 = arith.constant 0 : index
    %c0_1 = arith.constant 0 : index
    %c0_2 = arith.constant 0 : index
    %3 = vector.load %arg11[%c0, %c0_1, %c0_2] : memref<2x8x32xf32, #tpu.memory_space<vmem>>, vector<2x8x32xf32>
    %4 = vector.shape_cast %3 : vector<2x8x32xf32> to vector<16x32xf32>
    %5 = arith.truncf %4 : vector<16x32xf32> to vector<16x32xbf16>
    %c0_3 = arith.constant 0 : index
    %c0_4 = arith.constant 0 : index
    %c0_5 = arith.constant 0 : index
    %6 = vector.load %arg3[%c0_3, %c0_4, %c0_5] : memref<1x32x96xbf16, #tpu.memory_space<vmem>>, vector<1x32x96xbf16>
    %7 = vector.shape_cast %6 : vector<1x32x96xbf16> to vector<32x96xbf16>
    %cst = arith.constant dense<0.000000e+00> : vector<16x96xf32>
    %8 = tpu.matmul %5, %7, %cst {dimension_numbers = #tpu.dot_dimension_numbers<[1], [0], [0], [1], [0, 0, 1, 1], [], []>} : vector<16x32xbf16>, vector<32x96xbf16>, vector<16x96xf32> -> vector<16x96xf32>
    %c0_6 = arith.constant 0 : index
    %c0_7 = arith.constant 0 : index
    %c0_8 = arith.constant 0 : index
    %9 = vector.load %arg4[%c0_6, %c0_7, %c0_8] : memref<1x1x96xf32, #tpu.memory_space<vmem>>, vector<1x1x96xf32>
    %10 = vector.shape_cast %9 : vector<1x1x96xf32> to vector<1x96xf32>
    %11 = vector.broadcast %10 : vector<1x96xf32> to vector<16x96xf32>
    %12 = arith.addf %8, %11 : vector<16x96xf32>
    %13 = vector.extract_strided_slice %12 {offsets = [0, 0], sizes = [16, 32], strides = [1, 1]} : vector<16x96xf32> to vector<16x32xf32>
    %14 = vector.shape_cast %13 : vector<16x32xf32> to vector<2x8x32xf32>
    %15 = vector.extract_strided_slice %12 {offsets = [0, 32], sizes = [16, 32], strides = [1, 1]} : vector<16x96xf32> to vector<16x32xf32>
    %16 = vector.shape_cast %15 : vector<16x32xf32> to vector<2x8x32xf32>
    %17 = vector.extract_strided_slice %12 {offsets = [0, 64], sizes = [16, 32], strides = [1, 1]} : vector<16x96xf32> to vector<16x32xf32>
    %18 = vector.shape_cast %17 : vector<16x32xf32> to vector<2x8x32xf32>
    %19 = arith.truncf %14 : vector<2x8x32xf32> to vector<2x8x32xbf16>
    %20 = arith.truncf %16 : vector<2x8x32xf32> to vector<2x8x32xbf16>
    "tpu.trace_start"() <{level = 10 : i32, message = "bsd,btd->bst"}> : () -> ()
    %cst_9 = arith.constant dense<0.000000e+00> : vector<2x8x8xf32>
    %21 = tpu.matmul %19, %20, %cst_9 {dimension_numbers = #tpu.dot_dimension_numbers<[2], [2], [1], [1], [0, 0, 0, 1, 1, 1], [0], [0]>} : vector<2x8x32xbf16>, vector<2x8x32xbf16>, vector<2x8x8xf32> -> vector<2x8x8xf32>
    "tpu.trace_stop"() : () -> ()
    %cst_10 = arith.constant dense<0xFF800000> : vector<2x8xf32>
    %22 = vector.multi_reduction <maximumf>, %21, %cst_10 [2] : vector<2x8x8xf32> to vector<2x8xf32>
    %23 = vector.shape_cast %22 : vector<2x8xf32> to vector<2x8x1xf32>
    %24 = vector.broadcast %23 : vector<2x8x1xf32> to vector<2x8x8xf32>
    %25 = arith.subf %21, %24 : vector<2x8x8xf32>
    %26 = math.exp %25 : vector<2x8x8xf32>
    %cst_11 = arith.constant dense<0.000000e+00> : vector<2x8xf32>
    %27 = vector.multi_reduction <add>, %26, %cst_11 [2] : vector<2x8x8xf32> to vector<2x8xf32>
    %28 = vector.shape_cast %27 : vector<2x8xf32> to vector<2x8x1xf32>
    %29 = tpu.reciprocal %28 {approx = true} : vector<2x8x1xf32> -> vector<2x8x1xf32>
    %30 = arith.mulf %28, %29 : vector<2x8x1xf32>
    %cst_12 = arith.constant 2.000000e+00 : f32
    %31 = vector.broadcast %cst_12 : f32 to vector<2x8x1xf32>
    %32 = arith.subf %31, %30 : vector<2x8x1xf32>
    %33 = arith.mulf %29, %32 : vector<2x8x1xf32>
    %34 = vector.broadcast %33 : vector<2x8x1xf32> to vector<2x8x8xf32>
    %35 = arith.mulf %26, %34 : vector<2x8x8xf32>
    %36 = arith.truncf %35 : vector<2x8x8xf32> to vector<2x8x8xbf16>
    %37 = arith.truncf %18 : vector<2x8x32xf32> to vector<2x8x32xbf16>
    "tpu.trace_start"() <{level = 10 : i32, message = "bst,btd->bsd"}> : () -> ()
    %cst_13 = arith.constant dense<0.000000e+00> : vector<2x8x32xf32>
    %38 = tpu.matmul %36, %37, %cst_13 {dimension_numbers = #tpu.dot_dimension_numbers<[2], [1], [1], [2], [0, 0, 0, 1, 1, 2], [0], [0]>} : vector<2x8x8xbf16>, vector<2x8x32xbf16>, vector<2x8x32xf32> -> vector<2x8x32xf32>
    "tpu.trace_stop"() : () -> ()
    %39 = vector.shape_cast %38 : vector<2x8x32xf32> to vector<16x32xf32>
    %40 = arith.truncf %39 : vector<16x32xf32> to vector<16x32xbf16>
    %c0_14 = arith.constant 0 : index
    %c0_15 = arith.constant 0 : index
    %c0_16 = arith.constant 0 : index
    %41 = vector.load %arg5[%c0_14, %c0_15, %c0_16] : memref<1x32x32xbf16, #tpu.memory_space<vmem>>, vector<1x32x32xbf16>
    %42 = vector.shape_cast %41 : vector<1x32x32xbf16> to vector<32x32xbf16>
    %cst_17 = arith.constant dense<0.000000e+00> : vector<16x32xf32>
    %43 = tpu.matmul %40, %42, %cst_17 {dimension_numbers = #tpu.dot_dimension_numbers<[1], [0], [0], [1], [0, 0, 1, 1], [], []>} : vector<16x32xbf16>, vector<32x32xbf16>, vector<16x32xf32> -> vector<16x32xf32>
    %c0_18 = arith.constant 0 : index
    %c0_19 = arith.constant 0 : index
    %c0_20 = arith.constant 0 : index
    %44 = vector.load %arg6[%c0_18, %c0_19, %c0_20] : memref<1x1x32xf32, #tpu.memory_space<vmem>>, vector<1x1x32xf32>
    %45 = vector.shape_cast %44 : vector<1x1x32xf32> to vector<1x32xf32>
    %46 = vector.broadcast %45 : vector<1x32xf32> to vector<16x32xf32>
    %47 = arith.addf %43, %46 : vector<16x32xf32>
    %48 = arith.addf %4, %47 : vector<16x32xf32>
    %cst_21 = arith.constant dense<0.000000e+00> : vector<16xf32>
    %49 = vector.multi_reduction <add>, %48, %cst_21 [1] : vector<16x32xf32> to vector<16xf32>
    %50 = vector.shape_cast %49 : vector<16xf32> to vector<16x1xf32>
    %cst_22 = arith.constant 3.200000e+01 : f32
    %51 = vector.broadcast %cst_22 : f32 to vector<16x1xf32>
    %52 = arith.divf %50, %51 : vector<16x1xf32>
    %53 = vector.broadcast %52 : vector<16x1xf32> to vector<16x32xf32>
    %54 = arith.subf %48, %53 : vector<16x32xf32>
    %55 = arith.mulf %54, %54 : vector<16x32xf32>
    %cst_23 = arith.constant dense<0.000000e+00> : vector<16xf32>
    %56 = vector.multi_reduction <add>, %55, %cst_23 [1] : vector<16x32xf32> to vector<16xf32>
    %57 = vector.shape_cast %56 : vector<16xf32> to vector<16x1xf32>
    %cst_24 = arith.constant 3.200000e+01 : f32
    %58 = vector.broadcast %cst_24 : f32 to vector<16x1xf32>
    %59 = arith.divf %57, %58 : vector<16x1xf32>
    %cst_25 = arith.constant 9.99999974E-6 : f32
    %60 = vector.broadcast %cst_25 : f32 to vector<16x1xf32>
    %61 = arith.addf %59, %60 : vector<16x1xf32>
    %62 = math.rsqrt %61 : vector<16x1xf32>
    %63 = vector.broadcast %62 : vector<16x1xf32> to vector<16x32xf32>
    %64 = arith.mulf %54, %63 : vector<16x32xf32>
    %c0_26 = arith.constant 0 : index
    %c0_27 = arith.constant 0 : index
    %c0_28 = arith.constant 0 : index
    %65 = vector.load %arg7[%c0_26, %c0_27, %c0_28] : memref<1x1x32xf32, #tpu.memory_space<vmem>>, vector<1x1x32xf32>
    %66 = vector.shape_cast %65 : vector<1x1x32xf32> to vector<1x32xf32>
    %67 = vector.broadcast %66 : vector<1x32xf32> to vector<16x32xf32>
    %68 = arith.mulf %64, %67 : vector<16x32xf32>
    %c0_29 = arith.constant 0 : index
    %c0_30 = arith.constant 0 : index
    %c0_31 = arith.constant 0 : index
    %69 = vector.load %arg8[%c0_29, %c0_30, %c0_31] : memref<1x1x32xf32, #tpu.memory_space<vmem>>, vector<1x1x32xf32>
    %70 = vector.shape_cast %69 : vector<1x1x32xf32> to vector<1x32xf32>
    %71 = vector.broadcast %70 : vector<1x32xf32> to vector<16x32xf32>
    %72 = arith.addf %68, %71 : vector<16x32xf32>
    %73 = vector.shape_cast %35 : vector<2x8x8xf32> to vector<2x64xf32>
    %c0_32 = arith.constant 0 : index
    %c0_33 = arith.constant 0 : index
    %c0_34 = arith.constant 0 : index
    %74 = vector.load %arg10[%c0_32, %c0_33, %c0_34] : memref<1x2x64xf32, #tpu.memory_space<vmem>>, vector<1x2x64xf32>
    %75 = vector.shape_cast %74 : vector<1x2x64xf32> to vector<2x64xf32>
    %76 = vector.shape_cast %73 : vector<2x64xf32> to vector<1x2x64xf32>
    tpu.vector_store %arg10[%c0_32, %c0_33, %c0_34], %76 {strides = array<i32>} : memref<1x2x64xf32, #tpu.memory_space<vmem>>, vector<1x2x64xf32>,
    %c1_i32 = arith.constant 1 : i32
    %77 = arith.cmpi slt, %arg1, %c1_i32 : i32
    %78 = arith.extui %77 : i1 to i32
    %c0_i32_35 = arith.constant 0 : i32
    %79 = arith.cmpi ne, %78, %c0_i32_35 : i32
    scf.if %79 {
      %83 = vector.shape_cast %72 : vector<16x32xf32> to vector<2x8x32xf32>
      %c0_38 = arith.constant 0 : index
      %c0_39 = arith.constant 0 : index
      %c0_40 = arith.constant 0 : index
      %84 = vector.load %arg11[%c0_38, %c0_39, %c0_40] : memref<2x8x32xf32, #tpu.memory_space<vmem>>, vector<2x8x32xf32>
      tpu.vector_store %arg11[%c0_38, %c0_39, %c0_40], %83 {strides = array<i32>} : memref<2x8x32xf32, #tpu.memory_space<vmem>>, vector<2x8x32xf32>,
    } else {
    }
    %c1_i32_36 = arith.constant 1 : i32
    %80 = arith.cmpi eq, %arg1, %c1_i32_36 : i32
    %81 = arith.extui %80 : i1 to i32
    %c0_i32_37 = arith.constant 0 : i32
    %82 = arith.cmpi ne, %81, %c0_i32_37 : i32
    scf.if %82 {
      %83 = vector.shape_cast %72 : vector<16x32xf32> to vector<2x8x32xf32>
      %cst_38 = arith.constant dense<0.000000e+00> : vector<2x32xf32>
      %84 = vector.multi_reduction <add>, %83, %cst_38 [1] : vector<2x8x32xf32> to vector<2x32xf32>
      %cst_39 = arith.constant 8.000000e+00 : f32
      %85 = vector.broadcast %cst_39 : f32 to vector<2x32xf32>
      %86 = arith.divf %84, %85 : vector<2x32xf32>
      %c0_40 = arith.constant 0 : index
      %c0_41 = arith.constant 0 : index
      %87 = vector.load %arg9[%c0_40, %c0_41] : memref<2x32xf32, #tpu.memory_space<vmem>>, vector<2x32xf32>
      tpu.vector_store %arg9[%c0_40, %c0_41], %86 {strides = array<i32>} : memref<2x32xf32, #tpu.memory_space<vmem>>, vector<2x32xf32>,
    } else {
    }
    return
  }
  func.func @transform_0(%arg0: i32, %arg1: i32) -> (i32, i32, i32) {
    %c0_i32 = arith.constant 0 : i32
    %c0_i32_0 = arith.constant 0 : i32
    %c0_i32_1 = arith.constant 0 : i32
    return %arg0, %c0_i32, %c0_i32_0 : i32, i32, i32
  }
  func.func @transform_1(%arg0: i32, %arg1: i32) -> (i32, i32, i32) {
    %c0_i32 = arith.constant 0 : i32
    %c0_i32_0 = arith.constant 0 : i32
    %c0_i32_1 = arith.constant 0 : i32
    return %arg1, %c0_i32, %c0_i32_0 : i32, i32, i32
  }
  func.func @transform_2(%arg0: i32, %arg1: i32) -> (i32, i32, i32) {
    %c0_i32 = arith.constant 0 : i32
    %c0_i32_0 = arith.constant 0 : i32
    %c0_i32_1 = arith.constant 0 : i32
    return %arg1, %c0_i32, %c0_i32_0 : i32, i32, i32
  }
  func.func @transform_3(%arg0: i32, %arg1: i32) -> (i32, i32, i32) {
    %c0_i32 = arith.constant 0 : i32
    %c0_i32_0 = arith.constant 0 : i32
    %c0_i32_1 = arith.constant 0 : i32
    return %arg1, %c0_i32, %c0_i32_0 : i32, i32, i32
  }
  func.func @transform_4(%arg0: i32, %arg1: i32) -> (i32, i32, i32) {
    %c0_i32 = arith.constant 0 : i32
    %c0_i32_0 = arith.constant 0 : i32
    %c0_i32_1 = arith.constant 0 : i32
    return %arg1, %c0_i32, %c0_i32_0 : i32, i32, i32
  }
  func.func @transform_5(%arg0: i32, %arg1: i32) -> (i32, i32, i32) {
    %c0_i32 = arith.constant 0 : i32
    %c0_i32_0 = arith.constant 0 : i32
    %c0_i32_1 = arith.constant 0 : i32
    return %arg1, %c0_i32, %c0_i32_0 : i32, i32, i32
  }
  func.func @transform_6(%arg0: i32, %arg1: i32) -> (i32, i32, i32) {
    %c0_i32 = arith.constant 0 : i32
    %c0_i32_0 = arith.constant 0 : i32
    %c0_i32_1 = arith.constant 0 : i32
    return %arg1, %c0_i32, %c0_i32_0 : i32, i32, i32
  }
  func.func @transform_7(%arg0: i32, %arg1: i32) -> (i32, i32) {
    %c0_i32 = arith.constant 0 : i32
    %c0_i32_0 = arith.constant 0 : i32
    return %arg0, %c0_i32 : i32, i32
  }
  func.func @transform_8(%arg0: i32, %arg1: i32) -> (i32, i32, i32) {
    %c0_i32 = arith.constant 0 : i32
    %c0_i32_0 = arith.constant 0 : i32
    return %arg1, %arg0, %c0_i32 : i32, i32, i32
  }
}

</mosaic_0001>

<llo_original>
// kernel: tpu_custom_call.1
$region0: #{tpu_custom_call.1}
  #allocation0 [shape = 'u32[]', space=smem, size = 0x4, offset = 0x4, fixed_abs, tag = 'smem constant byte address 0x4 - core index']
  #allocation1 [shape = 'u32[144,128]{1,0:T(1,128)}', space=vmem, size = 0x12000, scoped, tag = 'internal scratch']
  #allocation2 [shape = 'f32[2,8,32]{2,1,0:T(8,128)}', space=vmem, size = 0x2000, scoped, tag = 'scratch operand']
  %s0 = inlined_call_operand.hbm [shape: f32[2,8,32], index: 0, kind: input, shape index: {}]
  %s1 = inlined_call_operand.hbm [shape: bf16[2,32,96], index: 1, kind: input, shape index: {}]
  %s2 = inlined_call_operand.vmem [shape: f32[2,1,96], index: 2, kind: input, shape index: {}]
  %s3 = inlined_call_operand.hbm [shape: bf16[2,32,32], index: 3, kind: input, shape index: {}]
  %s4 = inlined_call_operand.vmem [shape: f32[2,1,32], index: 4, kind: input, shape index: {}]
  %s5 = inlined_call_operand.vmem [shape: f32[2,1,32], index: 5, kind: input, shape index: {}]
  %s6 = inlined_call_operand.vmem [shape: f32[2,1,32], index: 6, kind: input, shape index: {}]
  %s7 = inlined_call_operand.hbm [shape: f32[2,32], index: 7, kind: output, shape index: {0}]
  %s8 = inlined_call_operand.hbm [shape: f32[2,2,64], index: 8, kind: output, shape index: {1}]
  %9 = xla_tuple %s7, %s8
  %s10 = sld [smem:[#allocation0]]
  $region93: #{tpu_custom_call.1} parent=0
    _
  %s12 = ssub.s32 1, %s10
  %s13 = scalar_select 0, %s12, %s10
  $region1: #{tpu_custom_call.1} parent=0
    #allocation3 [shape = 'u8[8192]{0}', space=vmem, size = 0x2000, scoped, tag = 'input window, operand 0, single buffered']
    #allocation4 [shape = 's32[2]{0}', space=sflag, size = 0x8, scoped, tag = 'scoped memory for tpu_custom_call.1']
    #allocation5 [shape = 's32[2]{0}', space=sflag, size = 0x8, scoped, tag = 'scoped memory for tpu_custom_call.1']
    #allocation6 [shape = 'u8[16384]{0}', space=vmem, size = 0x4000, scoped, tag = 'input window, operand 1']
    #allocation7 [shape = 's32[2]{0}', space=sflag, size = 0x8, scoped, tag = 'scoped memory for tpu_custom_call.1']
    #allocation8 [shape = 'u8[16384]{0}', space=vmem, size = 0x4000, scoped, tag = 'input window, operand 3']
    #allocation9 [shape = 'u8[1024]{0}', space=vmem, size = 0x400, scoped, tag = 'output window, operand 0, single buffered']
    #allocation10 [shape = 'u8[2048]{0}', space=vmem, size = 0x800, scoped, tag = 'output window, operand 1']
    #allocation11 [shape = 's32[2]{0}', space=sflag, size = 0x8, scoped, tag = 'scoped memory for tpu_custom_call.1']
    %14 = vsyncpa [#allocation4], 0
    %15 = vsyncpa [#allocation7], 0
    %s16 = scalar_lea.sflag [#allocation7], 1
    %17 = vsyncpa %s16, 0
    %18 = vsyncpa [#allocation5], 0
    %19 = vsyncpa [#allocation11], 0
    %s20 = scalar_lea.sflag [#allocation11], 1
    %21 = vsyncpa %s20, 0
    loop: start=0, step=1, limit=4
    $region2: #{tpu_custom_call.1} parent=1 // loop_pre_header
      _
    $region3: #{tpu_custom_call.1} parent=1 // loop_header
      %s23 = sphi 0, %s27
      %p24 = scmp.ge.s32.totalorder %s23, 4
      %s30 = sphi 0, %s42
      %s31 = sphi 0, %s38
      %s32 = sphi 0, %s30
      %s33 = sphi 0, %s31
      %s34 = sphi 0, %s32
      %s35 = sphi 0, %s33
      %s45 = sphi 0, %s47
      %s48 = sphi 0, %s45
      %s49 = sphi 0, %s48
      %s65 = sphi 0, %s49
      %s71 = sphi 0, %s73
      %s74 = sphi 0, %s71
      %s75 = sphi 0, %s74
      %s91 = sphi 0, %s75
      %s97 = sphi 0, %s99
      %s100 = sphi 0, %s97
      %s101 = sphi 0, %s100
      %s117 = sphi 0, %s101
      %s123 = sphi 0, %s125
      %s126 = sphi 0, %s123
      %s127 = sphi 0, %s126
      %s143 = sphi 0, %s127
      %s149 = sphi 0, %s151
      %s152 = sphi 0, %s149
      %s153 = sphi 0, %s152
      %s169 = sphi 0, %s153
      %s175 = sphi 0, %s177
      %s178 = sphi 0, %s175
      %s179 = sphi 0, %s178
      %s195 = sphi 0, %s179
      %s201 = sphi 0, %s203
      %s204 = sphi 0, %s201
      %s205 = sphi 0, %s204
      %s221 = sphi 0, %s205
      %s227 = sphi 0, %s229
      %s230 = sphi 0, %s227
      %s231 = sphi 0, %s230
      %s247 = sphi 0, %s231
      %s255 = sphi 0, %s257
      %s258 = sphi 0, %s255
      %s259 = sphi 0, %s258
      %s275 = sphi 0, %s259
    $region4: #{tpu_custom_call.1} parent=1 // loop_header_branch
      %26 = sbr.rel (%p24) target = $region8
    $region5: #{tpu_custom_call.1} parent=1 // loop_body
      %s28 = ssub.s32 %s23, 1
      %s29 = ssub.s32 %s23, 2
      %s36 = sadd.s32 1, %s31
      %p37 = scmp.ge.s32.totalorder %s36, 2
      %s38 = scalar_select %p37, 0, %s36
      %s39 = sadd.s32 1, %s30
      %s40 = scalar_select %p37, %s39, %s30
      %p41 = scmp.ge.s32.totalorder %s40, 1
      %s42 = scalar_select %p41, 0, %s40
      %s43 = ssub.s32 %s30, %s42
      %p44 = scmp.eq.s32.totalorder %s43, 0
      %s46 = sadd.s32 %s45, 1
      %s47 = scalar_select %p44, %s45, %s46
      %p50 = pneg %p44
      %p51 = scmp.eq.s32.totalorder %s23, 1
      %p52 = por %p50, %p51
      %p53 = scmp.ne.s32.totalorder %s45, %s48
      %p54 = scmp.eq.s32.totalorder %s23, 0
      %p55 = por %p53, %p54
      %p56 = scmp.ne.s32.totalorder %s45, %s48
      %p57 = scmp.eq.s32.totalorder %s28, 1
      %p58 = por %p56, %p57
      %p59 = scmp.ne.s32.totalorder %s48, %s49
      %p60 = scmp.eq.s32.totalorder %s28, 0
      %p61 = por %p59, %p60
      %p62 = scmp.ne.s32.totalorder %s48, %s49
      %p63 = scmp.eq.s32.totalorder %s29, 1
      %p64 = por %p62, %p63
      %p66 = scmp.ne.s32.totalorder %s49, %s65
      %p67 = scmp.eq.s32.totalorder %s29, 0
      %p68 = por %p66, %p67
      %s69 = ssub.s32 %s31, %s38
      %p70 = scmp.eq.s32.totalorder %s69, 0
      %s72 = sadd.s32 %s71, 1
      %s73 = scalar_select %p70, %s71, %s72
      %p76 = pneg %p70
      %p77 = scmp.eq.s32.totalorder %s23, 1
      %p78 = por %p76, %p77
      %p79 = scmp.ne.s32.totalorder %s71, %s74
      %p80 = scmp.eq.s32.totalorder %s23, 0
      %p81 = por %p79, %p80
      %p82 = scmp.ne.s32.totalorder %s71, %s74
      %p83 = scmp.eq.s32.totalorder %s28, 1
      %p84 = por %p82, %p83
      %p85 = scmp.ne.s32.totalorder %s74, %s75
      %p86 = scmp.eq.s32.totalorder %s28, 0
      %p87 = por %p85, %p86
      %p88 = scmp.ne.s32.totalorder %s74, %s75
      %p89 = scmp.eq.s32.totalorder %s29, 1
      %p90 = por %p88, %p89
      %p92 = scmp.ne.s32.totalorder %s75, %s91
      %p93 = scmp.eq.s32.totalorder %s29, 0
      %p94 = por %p92, %p93
      %s95 = ssub.s32 %s31, %s38
      %p96 = scmp.eq.s32.totalorder %s95, 0
      %s98 = sadd.s32 %s97, 1
      %s99 = scalar_select %p96, %s97, %s98
      %p102 = pneg %p96
      %p103 = scmp.eq.s32.totalorder %s23, 1
      %p104 = por %p102, %p103
      %p105 = scmp.ne.s32.totalorder %s97, %s100
      %p106 = scmp.eq.s32.totalorder %s23, 0
      %p107 = por %p105, %p106
      %p108 = scmp.ne.s32.totalorder %s97, %s100
      %p109 = scmp.eq.s32.totalorder %s28, 1
      %p110 = por %p108, %p109
      %p111 = scmp.ne.s32.totalorder %s100, %s101
      %p112 = scmp.eq.s32.totalorder %s28, 0
      %p113 = por %p111, %p112
      %p114 = scmp.ne.s32.totalorder %s100, %s101
      %p115 = scmp.eq.s32.totalorder %s29, 1
      %p116 = por %p114, %p115
      %p118 = scmp.ne.s32.totalorder %s101, %s117
      %p119 = scmp.eq.s32.totalorder %s29, 0
      %p120 = por %p118, %p119
      %s121 = ssub.s32 %s31, %s38
      %p122 = scmp.eq.s32.totalorder %s121, 0
      %s124 = sadd.s32 %s123, 1
      %s125 = scalar_select %p122, %s123, %s124
      %p128 = pneg %p122
      %p129 = scmp.eq.s32.totalorder %s23, 1
      %p130 = por %p128, %p129
      %p131 = scmp.ne.s32.totalorder %s123, %s126
      %p132 = scmp.eq.s32.totalorder %s23, 0
      %p133 = por %p131, %p132
      %p134 = scmp.ne.s32.totalorder %s123, %s126
      %p135 = scmp.eq.s32.totalorder %s28, 1
      %p136 = por %p134, %p135
      %p137 = scmp.ne.s32.totalorder %s126, %s127
      %p138 = scmp.eq.s32.totalorder %s28, 0
      %p139 = por %p137, %p138
      %p140 = scmp.ne.s32.totalorder %s126, %s127
      %p141 = scmp.eq.s32.totalorder %s29, 1
      %p142 = por %p140, %p141
      %p144 = scmp.ne.s32.totalorder %s127, %s143
      %p145 = scmp.eq.s32.totalorder %s29, 0
      %p146 = por %p144, %p145
      %s147 = ssub.s32 %s31, %s38
      %p148 = scmp.eq.s32.totalorder %s147, 0
      %s150 = sadd.s32 %s149, 1
      %s151 = scalar_select %p148, %s149, %s150
      %p154 = pneg %p148
      %p155 = scmp.eq.s32.totalorder %s23, 1
      %p156 = por %p154, %p155
      %p157 = scmp.ne.s32.totalorder %s149, %s152
      %p158 = scmp.eq.s32.totalorder %s23, 0
      %p159 = por %p157, %p158
      %p160 = scmp.ne.s32.totalorder %s149, %s152
      %p161 = scmp.eq.s32.totalorder %s28, 1
      %p162 = por %p160, %p161
      %p163 = scmp.ne.s32.totalorder %s152, %s153
      %p164 = scmp.eq.s32.totalorder %s28, 0
      %p165 = por %p163, %p164
      %p166 = scmp.ne.s32.totalorder %s152, %s153
      %p167 = scmp.eq.s32.totalorder %s29, 1
      %p168 = por %p166, %p167
      %p170 = scmp.ne.s32.totalorder %s153, %s169
      %p171 = scmp.eq.s32.totalorder %s29, 0
      %p172 = por %p170, %p171
      %s173 = ssub.s32 %s31, %s38
      %p174 = scmp.eq.s32.totalorder %s173, 0
      %s176 = sadd.s32 %s175, 1
      %s177 = scalar_select %p174, %s175, %s176
      %p180 = pneg %p174
      %p181 = scmp.eq.s32.totalorder %s23, 1
      %p182 = por %p180, %p181
      %p183 = scmp.ne.s32.totalorder %s175, %s178
      %p184 = scmp.eq.s32.totalorder %s23, 0
      %p185 = por %p183, %p184
      %p186 = scmp.ne.s32.totalorder %s175, %s178
      %p187 = scmp.eq.s32.totalorder %s28, 1
      %p188 = por %p186, %p187
      %p189 = scmp.ne.s32.totalorder %s178, %s179
      %p190 = scmp.eq.s32.totalorder %s28, 0
      %p191 = por %p189, %p190
      %p192 = scmp.ne.s32.totalorder %s178, %s179
      %p193 = scmp.eq.s32.totalorder %s29, 1
      %p194 = por %p192, %p193
      %p196 = scmp.ne.s32.totalorder %s179, %s195
      %p197 = scmp.eq.s32.totalorder %s29, 0
      %p198 = por %p196, %p197
      %s199 = ssub.s32 %s31, %s38
      %p200 = scmp.eq.s32.totalorder %s199, 0
      %s202 = sadd.s32 %s201, 1
      %s203 = scalar_select %p200, %s201, %s202
      %p206 = pneg %p200
      %p207 = scmp.eq.s32.totalorder %s23, 1
      %p208 = por %p206, %p207
      %p209 = scmp.ne.s32.totalorder %s201, %s204
      %p210 = scmp.eq.s32.totalorder %s23, 0
      %p211 = por %p209, %p210
      %p212 = scmp.ne.s32.totalorder %s201, %s204
      %p213 = scmp.eq.s32.totalorder %s28, 1
      %p214 = por %p212, %p213
      %p215 = scmp.ne.s32.totalorder %s204, %s205
      %p216 = scmp.eq.s32.totalorder %s28, 0
      %p217 = por %p215, %p216
      %p218 = scmp.ne.s32.totalorder %s204, %s205
      %p219 = scmp.eq.s32.totalorder %s29, 1
      %p220 = por %p218, %p219
      %p222 = scmp.ne.s32.totalorder %s205, %s221
      %p223 = scmp.eq.s32.totalorder %s29, 0
      %p224 = por %p222, %p223
      %s225 = ssub.s32 %s30, %s42
      %p226 = scmp.eq.s32.totalorder %s225, 0
      %s228 = sadd.s32 %s227, 1
      %s229 = scalar_select %p226, %s227, %s228
      %p232 = pneg %p226
      %p233 = scmp.eq.s32.totalorder %s23, 1
      %p234 = por %p232, %p233
      %p235 = scmp.ne.s32.totalorder %s227, %s230
      %p236 = scmp.eq.s32.totalorder %s23, 0
      %p237 = por %p235, %p236
      %p238 = scmp.ne.s32.totalorder %s227, %s230
      %p239 = scmp.eq.s32.totalorder %s28, 1
      %p240 = por %p238, %p239
      %p241 = scmp.ne.s32.totalorder %s230, %s231
      %p242 = scmp.eq.s32.totalorder %s28, 0
      %p243 = por %p241, %p242
      %p244 = scmp.ne.s32.totalorder %s230, %s231
      %p245 = scmp.eq.s32.totalorder %s29, 1
      %p246 = por %p244, %p245
      %p248 = scmp.ne.s32.totalorder %s231, %s247
      %p249 = scmp.eq.s32.totalorder %s29, 0
      %p250 = por %p248, %p249
      %s251 = ssub.s32 %s31, %s38
      %s252 = ssub.s32 %s30, %s42
      %s253 = sor.u32 %s251, %s252
      %p254 = scmp.eq.s32.totalorder %s253, 0
      %s256 = sadd.s32 %s255, 1
      %s257 = scalar_select %p254, %s255, %s256
      %p260 = pneg %p254
      %p261 = scmp.eq.s32.totalorder %s23, 1
      %p262 = por %p260, %p261
      %p263 = scmp.ne.s32.totalorder %s255, %s258
      %p264 = scmp.eq.s32.totalorder %s23, 0
      %p265 = por %p263, %p264
      %p266 = scmp.ne.s32.totalorder %s255, %s258
      %p267 = scmp.eq.s32.totalorder %s28, 1
      %p268 = por %p266, %p267
      %p269 = scmp.ne.s32.totalorder %s258, %s259
      %p270 = scmp.eq.s32.totalorder %s28, 0
      %p271 = por %p269, %p270
      %p272 = scmp.ne.s32.totalorder %s258, %s259
      %p273 = scmp.eq.s32.totalorder %s29, 1
      %p274 = por %p272, %p273
      %p276 = scmp.ne.s32.totalorder %s259, %s275
      %p277 = scmp.eq.s32.totalorder %s29, 0
      %p278 = por %p276, %p277
      %p279 = scmp.le.s32.totalorder 1, %s23
      %p280 = scmp.lt.s32.totalorder %s23, 3
      %p281 = pnand %p279, %p280
      %p282 = pneg %p281
      // Predicated region
      $region9: #{tpu_custom_call.1} parent=5 // pred_check
        _
      $region10: #{tpu_custom_call.1} parent=5 // pred_check_branch
        %284 = sbr.rel (%p281) target = $region12
      $region11: #{tpu_custom_call.1} parent=5 // pred_region
        %s285 = ssub.s32 %s23, 1
        // Predicated region
        $region13: #{tpu_custom_call.1} parent=11 // pred_check
          %p286 = pneg %p61
        $region14: #{tpu_custom_call.1} parent=11 // pred_check_branch
          %288 = sbr.rel (%p286) target = $region16
        $region15: #{tpu_custom_call.1} parent=11 // pred_region
          %s289 = smul.u32 2, %s32
          %s291 = ssub.s32 256, 256
          %292 = vsyncadd [#allocation4], %s291
          %s293 = smul.addr %s289, 128
          %s294 = scalar_lea.hbm %s0, %s293
          %s295 = sshll.u32 [#allocation3], 4
          %s296 = int_to_ptr.vmem [resolvable:$true] %s295
          %301 = dma.hbm_to_vmem [thread:$0]  %s294, 256, %s296, [#allocation4], 128, 128, 8
        $region16: #{tpu_custom_call.1} parent=11 // pred_fallthru
          _
      $region12: #{tpu_custom_call.1} parent=5 // pred_fallthru
        _
      %p302 = scmp.lt.s32.totalorder %s23, 2
      // Predicated region
      $region17: #{tpu_custom_call.1} parent=5 // pred_check
        %p303 = pneg %p302
      $region18: #{tpu_custom_call.1} parent=5 // pred_check_branch
        %305 = sbr.rel (%p303) target = $region20
      $region19: #{tpu_custom_call.1} parent=5 // pred_region
        // Predicated region
        $region21: #{tpu_custom_call.1} parent=19 // pred_check
          %p306 = pneg %p81
        $region22: #{tpu_custom_call.1} parent=19 // pred_check_branch
          %308 = sbr.rel (%p306) target = $region24
        $region23: #{tpu_custom_call.1} parent=19 // pred_region
          %s309 = sand.u32 %s23, 1
          %s310 = scalar_lea.sflag [#allocation7], %s309
          %s311 = sand.u32 %s71, 1
          %s312 = smul.addr %s311, 16
          %s313 = scalar_lea.vmem [#allocation6], %s312
          %s315 = ssub.s32 256, 256
          %316 = vsyncadd %s310, %s315
          %s317 = smul.addr %s31, 4
          %s318 = smul.addr %s317, 64
          %s319 = scalar_lea.hbm %s1, %s318
          %s320 = sshll.u32 %s313, 4
          %s321 = int_to_ptr.vmem [resolvable:$true] %s320
          %326 = dma.hbm_to_vmem [thread:$0]  %s319, 256, %s321, %s310, 64, 64, 4
        $region24: #{tpu_custom_call.1} parent=19 // pred_fallthru
          _
        // Predicated region
        $region25: #{tpu_custom_call.1} parent=19 // pred_check
          %p327 = pneg %p107
        $region26: #{tpu_custom_call.1} parent=19 // pred_check_branch
          %329 = sbr.rel (%p327) target = $region28
        $region27: #{tpu_custom_call.1} parent=19 // pred_region
          %p330 = scmp.lt.s32.totalorder %s31, 1
          %s331 = scalar_select %p330, %s31, 1
          %s332 = scalar_lea.vmem %s2, %s331
        $region28: #{tpu_custom_call.1} parent=19 // pred_fallthru
          _
        // Predicated region
        $region29: #{tpu_custom_call.1} parent=19 // pred_check
          %p333 = pneg %p133
        $region30: #{tpu_custom_call.1} parent=19 // pred_check_branch
          %335 = sbr.rel (%p333) target = $region32
        $region31: #{tpu_custom_call.1} parent=19 // pred_region
          %s336 = sand.u32 %s23, 1
          %s337 = scalar_lea.sflag [#allocation7], %s336
          %s338 = sand.u32 %s123, 1
          %s339 = smul.addr %s338, 16
          %s340 = scalar_lea.vmem [#allocation8], %s339
          %s342 = ssub.s32 256, 256
          %343 = vsyncadd %s337, %s342
          %s344 = smul.addr %s31, 4
          %s345 = smul.addr %s344, 64
          %s346 = scalar_lea.hbm %s3, %s345
          %s347 = sshll.u32 %s340, 4
          %s348 = int_to_ptr.vmem [resolvable:$true] %s347
          %353 = dma.hbm_to_vmem [thread:$0]  %s346, 256, %s348, %s337, 64, 64, 4
        $region32: #{tpu_custom_call.1} parent=19 // pred_fallthru
          _
        // Predicated region
        $region33: #{tpu_custom_call.1} parent=19 // pred_check
          %p354 = pneg %p159
        $region34: #{tpu_custom_call.1} parent=19 // pred_check_branch
          %356 = sbr.rel (%p354) target = $region36
        $region35: #{tpu_custom_call.1} parent=19 // pred_region
          %p357 = scmp.lt.s32.totalorder %s31, 1
          %s358 = scalar_select %p357, %s31, 1
          %s359 = scalar_lea.vmem %s4, %s358
        $region36: #{tpu_custom_call.1} parent=19 // pred_fallthru
          _
        // Predicated region
        $region37: #{tpu_custom_call.1} parent=19 // pred_check
          %p360 = pneg %p185
        $region38: #{tpu_custom_call.1} parent=19 // pred_check_branch
          %362 = sbr.rel (%p360) target = $region40
        $region39: #{tpu_custom_call.1} parent=19 // pred_region
          %p363 = scmp.lt.s32.totalorder %s31, 1
          %s364 = scalar_select %p363, %s31, 1
          %s365 = scalar_lea.vmem %s5, %s364
        $region40: #{tpu_custom_call.1} parent=19 // pred_fallthru
          _
        // Predicated region
        $region41: #{tpu_custom_call.1} parent=19 // pred_check
          %p366 = pneg %p211
        $region42: #{tpu_custom_call.1} parent=19 // pred_check_branch
          %368 = sbr.rel (%p366) target = $region44
        $region43: #{tpu_custom_call.1} parent=19 // pred_region
          %p369 = scmp.lt.s32.totalorder %s31, 1
          %s370 = scalar_select %p369, %s31, 1
          %s371 = scalar_lea.vmem %s6, %s370
        $region44: #{tpu_custom_call.1} parent=19 // pred_fallthru
          _
      $region20: #{tpu_custom_call.1} parent=5 // pred_fallthru
        _
      %p372 = scmp.le.s32.totalorder 1, %s23
      %p373 = scmp.lt.s32.totalorder %s23, 3
      %p374 = pnand %p372, %p373
      %p375 = pneg %p374
      // Predicated region
      $region45: #{tpu_custom_call.1} parent=5 // pred_check
        _
      $region46: #{tpu_custom_call.1} parent=5 // pred_check_branch
        %377 = sbr.rel (%p374) target = $region48
      $region47: #{tpu_custom_call.1} parent=5 // pred_region
        %s378 = ssub.s32 %s23, 1
        // Predicated region
        $region49: #{tpu_custom_call.1} parent=47 // pred_check
          %p379 = pneg %p61
        $region50: #{tpu_custom_call.1} parent=47 // pred_check_branch
          %381 = sbr.rel (%p379) target = $region52
        $region51: #{tpu_custom_call.1} parent=47 // pred_region
          %382 = dma.done [#allocation4], 256
        $region52: #{tpu_custom_call.1} parent=47 // pred_fallthru
          _
        %s383 = sand.u32 %s28, 1
        %s384 = scalar_lea.sflag [#allocation7], %s383
        %s385 = sand.u32 %s74, 1
        %s386 = smul.addr %s385, 16
        %s387 = scalar_lea.vmem [#allocation6], %s386
        // Predicated region
        $region53: #{tpu_custom_call.1} parent=47 // pred_check
          %p388 = pneg %p87
        $region54: #{tpu_custom_call.1} parent=47 // pred_check_branch
          %390 = sbr.rel (%p388) target = $region56
        $region55: #{tpu_custom_call.1} parent=47 // pred_region
          %391 = dma.done %s384, 256
        $region56: #{tpu_custom_call.1} parent=47 // pred_fallthru
          _
        %s392 = sand.u32 %s28, 1
        %s393 = scalar_lea.sflag [#allocation7], %s392
        %s394 = sand.u32 %s126, 1
        %s395 = smul.addr %s394, 16
        %s396 = scalar_lea.vmem [#allocation8], %s395
        // Predicated region
        $region57: #{tpu_custom_call.1} parent=47 // pred_check
          %p397 = pneg %p139
        $region58: #{tpu_custom_call.1} parent=47 // pred_check_branch
          %399 = sbr.rel (%p397) target = $region60
        $region59: #{tpu_custom_call.1} parent=47 // pred_region
          %400 = dma.done %s393, 256
        $region60: #{tpu_custom_call.1} parent=47 // pred_fallthru
          _
        %p401 = pneg %p61
        %p402 = pneg %p58
        %s403 = sand.u32 %s28, 1
        %s404 = scalar_lea.sflag [#allocation7], %s403
        %s405 = sand.u32 %s74, 1
        %s406 = smul.addr %s405, 16
        %s407 = scalar_lea.vmem [#allocation6], %s406
        %p408 = pneg %p87
        %p409 = pneg %p84
        %p410 = scmp.lt.s32.totalorder %s33, 1
        %s411 = scalar_select %p410, %s33, 1
        %s412 = scalar_lea.vmem %s2, %s411
        %p413 = pneg %p113
        %p414 = pneg %p110
        %s415 = sand.u32 %s28, 1
        %s416 = scalar_lea.sflag [#allocation7], %s415
        %s417 = sand.u32 %s126, 1
        %s418 = smul.addr %s417, 16
        %s419 = scalar_lea.vmem [#allocation8], %s418
        %p420 = pneg %p139
        %p421 = pneg %p136
        %p422 = scmp.lt.s32.totalorder %s33, 1
        %s423 = scalar_select %p422, %s33, 1
        %s424 = scalar_lea.vmem %s4, %s423
        %p425 = pneg %p165
        %p426 = pneg %p162
        %p427 = scmp.lt.s32.totalorder %s33, 1
        %s428 = scalar_select %p427, %s33, 1
        %s429 = scalar_lea.vmem %s5, %s428
        %p430 = pneg %p191
        %p431 = pneg %p188
        %p432 = scmp.lt.s32.totalorder %s33, 1
        %s433 = scalar_select %p432, %s33, 1
        %s434 = scalar_lea.vmem %s6, %s433
        %p435 = pneg %p217
        %p436 = pneg %p214
        %p437 = pneg %p243
        %p438 = pneg %p240
        %p439 = pneg %p271
        %p440 = pneg %p268
        %s441 = sand.u32 %s258, 1
        %s442 = scalar_lea.sflag [#allocation11], %s441
        %s443 = sand.u32 %s258, 1
        %s444 = smul.addr %s443, 2
        %s445 = scalar_lea.vmem [#allocation10], %s444
        %s446 = smul.u32 2, %s32
        %p447 = scmp.lt.s32.totalorder %s33, 1
        %s448 = scalar_select %p447, %s33, 1
        %s449 = scalar_lea.vmem %s2, %s448
        %p450 = scmp.lt.s32.totalorder %s33, 1
        %s451 = scalar_select %p450, %s33, 1
        %s452 = scalar_lea.vmem %s4, %s451
        %p453 = scmp.lt.s32.totalorder %s33, 1
        %s454 = scalar_select %p453, %s33, 1
        %s455 = scalar_lea.vmem %s5, %s454
        %p456 = scmp.lt.s32.totalorder %s33, 1
        %s457 = scalar_select %p456, %s33, 1
        %s458 = scalar_lea.vmem %s6, %s457
        %p460 = scmp.eq.s32.totalorder %s33, 0
        // Predicated region
        $region61: #{tpu_custom_call.1} parent=47 // pred_check
          %p461 = pneg %p460
        $region62: #{tpu_custom_call.1} parent=47 // pred_check_branch
          %463 = sbr.rel (%p461) target = $region64
        $region63: #{tpu_custom_call.1} parent=47 // pred_region
          %v464 = vld [vmem:[#allocation3] sm:$0xff]
          %v465 = vld [vmem:[#allocation3 + $0x8] sm:$0xff]
          %vm466 = vcmask 261120
          %467 = vst.msk [vmem:[#allocation2] sm:$0xff] %vm466, %v464
          %468 = vst.msk [vmem:[#allocation2 + $0x8] sm:$0xff] %vm466, %v465
        $region64: #{tpu_custom_call.1} parent=47 // pred_fallthru
          _
        %v469 = vld [vmem:[#allocation2] sm:$0xff]
        %v470 = vld [vmem:[#allocation2 + $0x8] sm:$0xff]
        %v471 = vpack.c.bf16 %v470, %v469
        %v472 = vld [vmem:[%s387] sm:$0xf]
        %v473 = vld [vmem:[%s387 + $0x4] sm:$0xf]
        %v474 = vld [vmem:[%s387 + $0x8] sm:$0xf]
        %v475 = vld [vmem:[%s387 + $0xc] sm:$0xf]
        %v476 = vld [vmem:[%s449] sm:$0x1]
        %v478 = vlaneseq
        %v479 = vshrl.u32 %v478, 7
        %v480 = vsub.s32 0, %v479
        %v481 = vrot.slane %v476, %v480
        %v487 = vunpack.c.l.b16 %v472
        %v488 = vunpack.c.l.b16 %v473
        %v489 = vunpack.c.l.b16 %v474
        %v490 = vunpack.c.l.b16 %v475
        %v491 = vpack.c.b16 %v488, %v487
        %v492 = vpack.c.b16 %v490, %v489
        %vm495 = vcmask 261120
        %v497 = vsel %vm495, %v471, 0
        %499 = vmatprep.subr.bf16.mxu0 0
        %500 = vmatpush1.bf16.msra.mxu0 0
        %501 = vmatprep.subr.bf16.mxu0 0
        %502 = vmatpush1.bf16.msra.mxu0 0
        %503 = vmatprep.subr.bf16.mxu0 0
        %504 = vmatpush1.bf16.msra.mxu0 0
        %505 = vmatprep.subr.bf16.mxu0 0
        %506 = vmatpush1.bf16.msra.mxu0 0
        %507 = vmatprep.subr.bf16.mxu0 0
        %508 = vmatpush1.bf16.msra.mxu0 0
        %509 = vmatprep.subr.bf16.mxu0 0
        %510 = vmatpush1.bf16.msra.mxu0 0
        %511 = vmatprep.subr.bf16.mxu0 0
        %512 = vmatpush1.bf16.msra.mxu0 %v492
        %513 = vmatprep.subr.bf16.mxu0 0
        %514 = vmatpush1.bf16.msra.mxu0 %v491
        %515 = vmatprep.subr.bf16.mxu0 0
        %516 = vmatpush2.bf16.msra.mxu0 0
        %517 = vmatprep.subr.bf16.mxu0 0
        %518 = vmatpush2.bf16.msra.mxu0 0
        %519 = vmatprep.subr.bf16.mxu0 0
        %520 = vmatpush2.bf16.msra.mxu0 0
        %521 = vmatprep.subr.bf16.mxu0 0
        %522 = vmatpush2.bf16.msra.mxu0 0
        %523 = vmatprep.subr.bf16.mxu0 0
        %524 = vmatpush2.bf16.msra.mxu0 0
        %525 = vmatprep.subr.bf16.mxu0 0
        %526 = vmatpush2.bf16.msra.mxu0 0
        %527 = vmatprep.subr.bf16.mxu0 0
        %528 = vmatpush2.bf16.msra.mxu0 0
        %529 = vmatprep.subr.bf16.mxu0 0
        %530 = vmatpush2.bf16.msra.mxu0 0
        %531 = vmatprep.mubr.bf16.mxu0 0
        %532 = vmatmul.mubr.bf16.gmra.mxu0 %v497
        %v533 = vpop.f32.mrf.mxu0
        %v534 = vadd.f32 %v481, %v533
        %v535 = vpop.f32.mrf.mxu0
        %v536 = vpop.f32.mrf.mxu0
        %v537 = vadd.f32 %v481, %v536
        %v538 = vpop.f32.mrf.mxu0
        %539 = vdwg.mxu0
        %v540 = vpack.c.bf16 %v534, %v534
        %v541 = vpack.c.bf16 %v537, %v537
        %543 = vrot.lane.b32.xlu0 %v540, 96
        %v544 = vpop.permute.xlu0 %543
        %v546 = vsel %vm495, %v540, 0
        %v549 = vsel %vm495, %v544, 0
        %551 = vmatprep.subr.bf16.mxu0 0
        %552 = vmatpush1.bf16.xpose.msra.mxu0 0
        %553 = vmatprep.subr.bf16.mxu0 0
        %554 = vmatpush1.bf16.xpose.msra.mxu0 0
        %555 = vmatprep.subr.bf16.mxu0 0
        %556 = vmatpush1.bf16.xpose.msra.mxu0 0
        %557 = vmatprep.subr.bf16.mxu0 0
        %558 = vmatpush1.bf16.xpose.msra.mxu0 0
        %559 = vmatprep.subr.bf16.mxu0 0
        %560 = vmatpush1.bf16.xpose.msra.mxu0 0
        %561 = vmatprep.subr.bf16.mxu0 0
        %562 = vmatpush1.bf16.xpose.msra.mxu0 0
        %563 = vmatprep.subr.bf16.mxu0 0
        %564 = vmatpush1.bf16.xpose.msra.mxu0 0
        %565 = vmatprep.subr.bf16.mxu0 0
        %566 = vmatpush1.bf16.xpose.msra.mxu0 %v549
        %567 = vmatprep.subr.bf16.mxu0 0
        %568 = vmatpush2.bf16.xpose.msra.mxu0 0
        %569 = vmatprep.subr.bf16.mxu0 0
        %570 = vmatpush2.bf16.xpose.msra.mxu0 0
        %571 = vmatprep.subr.bf16.mxu0 0
        %572 = vmatpush2.bf16.xpose.msra.mxu0 0
        %573 = vmatprep.subr.bf16.mxu0 0
        %574 = vmatpush2.bf16.xpose.msra.mxu0 0
        %575 = vmatprep.subr.bf16.mxu0 0
        %576 = vmatpush2.bf16.xpose.msra.mxu0 0
        %577 = vmatprep.subr.bf16.mxu0 0
        %578 = vmatpush2.bf16.xpose.msra.mxu0 0
        %579 = vmatprep.subr.bf16.mxu0 0
        %580 = vmatpush2.bf16.xpose.msra.mxu0 0
        %581 = vmatprep.subr.bf16.mxu0 0
        %582 = vmatpush2.bf16.xpose.msra.mxu0 0
        %583 = vmatprep.mubr.bf16.mxu0 0
        %584 = vmatmul.mubr.bf16.gmra.mxu0 %v546
        %v585 = vpop.f32.mrf.mxu0
        %v586 = vadd.f32 0.0, %v585
        %v587 = vpop.f32.mrf.mxu0
        %v588 = vpop.f32.mrf.mxu0
        %v589 = vpop.f32.mrf.mxu0
        %590 = vdwg.mxu0
        %592 = vrot.lane.b32.xlu0 %v541, 96
        %v593 = vpop.permute.xlu0 %592
        %v595 = vsel %vm495, %v541, 0
        %v598 = vsel %vm495, %v593, 0
        %600 = vmatprep.subr.bf16.mxu0 0
        %601 = vmatpush1.bf16.xpose.msra.mxu0 0
        %602 = vmatprep.subr.bf16.mxu0 0
        %603 = vmatpush1.bf16.xpose.msra.mxu0 0
        %604 = vmatprep.subr.bf16.mxu0 0
        %605 = vmatpush1.bf16.xpose.msra.mxu0 0
        %606 = vmatprep.subr.bf16.mxu0 0
        %607 = vmatpush1.bf16.xpose.msra.mxu0 0
        %608 = vmatprep.subr.bf16.mxu0 0
        %609 = vmatpush1.bf16.xpose.msra.mxu0 0
        %610 = vmatprep.subr.bf16.mxu0 0
        %611 = vmatpush1.bf16.xpose.msra.mxu0 0
        %612 = vmatprep.subr.bf16.mxu0 0
        %613 = vmatpush1.bf16.xpose.msra.mxu0 0
        %614 = vmatprep.subr.bf16.mxu0 0
        %615 = vmatpush1.bf16.xpose.msra.mxu0 %v598
        %616 = vmatprep.subr.bf16.mxu0 0
        %617 = vmatpush2.bf16.xpose.msra.mxu0 0
        %618 = vmatprep.subr.bf16.mxu0 0
        %619 = vmatpush2.bf16.xpose.msra.mxu0 0
        %620 = vmatprep.subr.bf16.mxu0 0
        %621 = vmatpush2.bf16.xpose.msra.mxu0 0
        %622 = vmatprep.subr.bf16.mxu0 0
        %623 = vmatpush2.bf16.xpose.msra.mxu0 0
        %624 = vmatprep.subr.bf16.mxu0 0
        %625 = vmatpush2.bf16.xpose.msra.mxu0 0
        %626 = vmatprep.subr.bf16.mxu0 0
        %627 = vmatpush2.bf16.xpose.msra.mxu0 0
        %628 = vmatprep.subr.bf16.mxu0 0
        %629 = vmatpush2.bf16.xpose.msra.mxu0 0
        %630 = vmatprep.subr.bf16.mxu0 0
        %631 = vmatpush2.bf16.xpose.msra.mxu0 0
        %632 = vmatprep.mubr.bf16.mxu0 0
        %633 = vmatmul.mubr.bf16.gmra.mxu0 %v595
        %v634 = vpop.f32.mrf.mxu0
        %v635 = vadd.f32 0.0, %v634
        %v636 = vpop.f32.mrf.mxu0
        %v637 = vpop.f32.mrf.mxu0
        %v638 = vpop.f32.mrf.mxu0
        %639 = vdwg.mxu0
        %vm640 = vcmask 64512
        %v641 = vsel %vm640, %v586, -inf
        %642 = vmax.xlane.f32.xlu0 %v641
        %v643 = vpop.xlane.xlu0 %642
        %v644 = vsel %vm640, %v635, -inf
        %645 = vmax.xlane.f32.xlu0 %v644
        %v646 = vpop.xlane.xlu0 %645
        %v647 = vsub.f32 %v586, %v643
        %v648 = vsub.f32 %v635, %v646
        %v649 = vmul.f32 %v647, 1.442695
        %v650 = vpow.pop %v649
        %v651 = vmul.f32 %v648, 1.442695
        %v652 = vpow.pop %v651
        %v653 = vsel %vm640, %v650, 0.0
        %654 = vadd.xlane.f32.xlu0 %v653
        %v655 = vpop.xlane.xlu0 %654
        %v656 = vsel %vm640, %v652, 0.0
        %657 = vadd.xlane.f32.xlu0 %v656
        %v658 = vpop.xlane.xlu0 %657
        %v659 = vrcp.pop %v655
        %v660 = vrcp.pop %v658
        %v661 = vmul.f32 %v655, %v659
        %v662 = vmul.f32 %v658, %v660
        %v663 = vsub.f32 2.0, %v661
        %v664 = vsub.f32 2.0, %v662
        %v665 = vmul.f32 %v659, %v663
        %v666 = vmul.f32 %v660, %v664
        %v667 = vmul.f32 %v650, %v665
        %v668 = vmul.f32 %v652, %v666
        %v669 = vpack.c.bf16 %v667, %v667
        %v670 = vpack.c.bf16 %v668, %v668
        %671 = vrot.lane.b32.xlu0 %v540, 64
        %v672 = vpop.permute.xlu0 %671
        %v674 = vsel %vm640, %v669, 0
        %vm676 = vcmask 1043456
        %v678 = vsel %vm676, %v672, 0
        %680 = vmatprep.subr.bf16.mxu0 0
        %681 = vmatpush1.bf16.msra.mxu0 0
        %682 = vmatprep.subr.bf16.mxu0 0
        %683 = vmatpush1.bf16.msra.mxu0 0
        %684 = vmatprep.subr.bf16.mxu0 0
        %685 = vmatpush1.bf16.msra.mxu0 0
        %686 = vmatprep.subr.bf16.mxu0 0
        %687 = vmatpush1.bf16.msra.mxu0 0
        %688 = vmatprep.subr.bf16.mxu0 0
        %689 = vmatpush1.bf16.msra.mxu0 0
        %690 = vmatprep.subr.bf16.mxu0 0
        %691 = vmatpush1.bf16.msra.mxu0 0
        %692 = vmatprep.subr.bf16.mxu0 0
        %693 = vmatpush1.bf16.msra.mxu0 0
        %694 = vmatprep.subr.bf16.mxu0 0
        %695 = vmatpush1.bf16.msra.mxu0 %v678
        %696 = vmatprep.subr.bf16.mxu0 0
        %697 = vmatpush2.bf16.msra.mxu0 0
        %698 = vmatprep.subr.bf16.mxu0 0
        %699 = vmatpush2.bf16.msra.mxu0 0
        %700 = vmatprep.subr.bf16.mxu0 0
        %701 = vmatpush2.bf16.msra.mxu0 0
        %702 = vmatprep.subr.bf16.mxu0 0
        %703 = vmatpush2.bf16.msra.mxu0 0
        %704 = vmatprep.subr.bf16.mxu0 0
        %705 = vmatpush2.bf16.msra.mxu0 0
        %706 = vmatprep.subr.bf16.mxu0 0
        %707 = vmatpush2.bf16.msra.mxu0 0
        %708 = vmatprep.subr.bf16.mxu0 0
        %709 = vmatpush2.bf16.msra.mxu0 0
        %710 = vmatprep.subr.bf16.mxu0 0
        %711 = vmatpush2.bf16.msra.mxu0 0
        %712 = vmatprep.mubr.bf16.mxu0 0
        %713 = vmatmul.mubr.bf16.gmra.mxu0 %v674
        %v714 = vpop.f32.mrf.mxu0
        %v715 = vadd.f32 0.0, %v714
        %v716 = vpop.f32.mrf.mxu0
        %v717 = vpop.f32.mrf.mxu0
        %v718 = vpop.f32.mrf.mxu0
        %719 = vdwg.mxu0
        %720 = vrot.lane.b32.xlu0 %v541, 64
        %v721 = vpop.permute.xlu0 %720
        %v723 = vsel %vm640, %v670, 0
        %v726 = vsel %vm676, %v721, 0
        %728 = vmatprep.subr.bf16.mxu0 0
        %729 = vmatpush1.bf16.msra.mxu0 0
        %730 = vmatprep.subr.bf16.mxu0 0
        %731 = vmatpush1.bf16.msra.mxu0 0
        %732 = vmatprep.subr.bf16.mxu0 0
        %733 = vmatpush1.bf16.msra.mxu0 0
        %734 = vmatprep.subr.bf16.mxu0 0
        %735 = vmatpush1.bf16.msra.mxu0 0
        %736 = vmatprep.subr.bf16.mxu0 0
        %737 = vmatpush1.bf16.msra.mxu0 0
        %738 = vmatprep.subr.bf16.mxu0 0
        %739 = vmatpush1.bf16.msra.mxu0 0
        %740 = vmatprep.subr.bf16.mxu0 0
        %741 = vmatpush1.bf16.msra.mxu0 0
        %742 = vmatprep.subr.bf16.mxu0 0
        %743 = vmatpush1.bf16.msra.mxu0 %v726
        %744 = vmatprep.subr.bf16.mxu0 0
        %745 = vmatpush2.bf16.msra.mxu0 0
        %746 = vmatprep.subr.bf16.mxu0 0
        %747 = vmatpush2.bf16.msra.mxu0 0
        %748 = vmatprep.subr.bf16.mxu0 0
        %749 = vmatpush2.bf16.msra.mxu0 0
        %750 = vmatprep.subr.bf16.mxu0 0
        %751 = vmatpush2.bf16.msra.mxu0 0
        %752 = vmatprep.subr.bf16.mxu0 0
        %753 = vmatpush2.bf16.msra.mxu0 0
        %754 = vmatprep.subr.bf16.mxu0 0
        %755 = vmatpush2.bf16.msra.mxu0 0
        %756 = vmatprep.subr.bf16.mxu0 0
        %757 = vmatpush2.bf16.msra.mxu0 0
        %758 = vmatprep.subr.bf16.mxu0 0
        %759 = vmatpush2.bf16.msra.mxu0 0
        %760 = vmatprep.mubr.bf16.mxu0 0
        %761 = vmatmul.mubr.bf16.gmra.mxu0 %v723
        %v762 = vpop.f32.mrf.mxu0
        %v763 = vadd.f32 0.0, %v762
        %v764 = vpop.f32.mrf.mxu0
        %v765 = vpop.f32.mrf.mxu0
        %v766 = vpop.f32.mrf.mxu0
        %767 = vdwg.mxu0
        %v768 = vpack.c.bf16 %v763, %v715
        %v769 = vld [vmem:[%s396] sm:$0xf]
        %v770 = vld [vmem:[%s396 + $0x4] sm:$0xf]
        %v771 = vld [vmem:[%s396 + $0x8] sm:$0xf]
        %v772 = vld [vmem:[%s396 + $0xc] sm:$0xf]
        %v773 = vld [vmem:[%s452] sm:$0x1]
        %v775 = vlaneseq
        %v776 = vshrl.u32 %v775, 7
        %v777 = vsub.s32 0, %v776
        %v778 = vrot.slane %v773, %v777
        %v784 = vunpack.c.l.b16 %v769
        %v785 = vunpack.c.l.b16 %v770
        %v786 = vunpack.c.l.b16 %v771
        %v787 = vunpack.c.l.b16 %v772
        %v788 = vpack.c.b16 %v785, %v784
        %v789 = vpack.c.b16 %v787, %v786
        %v793 = vsel %vm495, %v768, 0
        %795 = vmatprep.subr.bf16.mxu0 0
        %796 = vmatpush1.bf16.msra.mxu0 0
        %797 = vmatprep.subr.bf16.mxu0 0
        %798 = vmatpush1.bf16.msra.mxu0 0
        %799 = vmatprep.subr.bf16.mxu0 0
        %800 = vmatpush1.bf16.msra.mxu0 0
        %801 = vmatprep.subr.bf16.mxu0 0
        %802 = vmatpush1.bf16.msra.mxu0 0
        %803 = vmatprep.subr.bf16.mxu0 0
        %804 = vmatpush1.bf16.msra.mxu0 0
        %805 = vmatprep.subr.bf16.mxu0 0
        %806 = vmatpush1.bf16.msra.mxu0 0
        %807 = vmatprep.subr.bf16.mxu0 0
        %808 = vmatpush1.bf16.msra.mxu0 %v789
        %809 = vmatprep.subr.bf16.mxu0 0
        %810 = vmatpush1.bf16.msra.mxu0 %v788
        %811 = vmatprep.subr.bf16.mxu0 0
        %812 = vmatpush2.bf16.msra.mxu0 0
        %813 = vmatprep.subr.bf16.mxu0 0
        %814 = vmatpush2.bf16.msra.mxu0 0
        %815 = vmatprep.subr.bf16.mxu0 0
        %816 = vmatpush2.bf16.msra.mxu0 0
        %817 = vmatprep.subr.bf16.mxu0 0
        %818 = vmatpush2.bf16.msra.mxu0 0
        %819 = vmatprep.subr.bf16.mxu0 0
        %820 = vmatpush2.bf16.msra.mxu0 0
        %821 = vmatprep.subr.bf16.mxu0 0
        %822 = vmatpush2.bf16.msra.mxu0 0
        %823 = vmatprep.subr.bf16.mxu0 0
        %824 = vmatpush2.bf16.msra.mxu0 0
        %825 = vmatprep.subr.bf16.mxu0 0
        %826 = vmatpush2.bf16.msra.mxu0 0
        %827 = vmatprep.mubr.bf16.mxu0 0
        %828 = vmatmul.mubr.bf16.gmra.mxu0 %v793
        %v829 = vpop.f32.mrf.mxu0
        %v830 = vadd.f32 %v778, %v829
        %v831 = vpop.f32.mrf.mxu0
        %v832 = vpop.f32.mrf.mxu0
        %v833 = vadd.f32 %v778, %v832
        %v834 = vpop.f32.mrf.mxu0
        %835 = vdwg.mxu0
        %v836 = vadd.f32 %v469, %v830
        %v837 = vadd.f32 %v470, %v833
        %v838 = vsel %vm495, %v836, 0.0
        %839 = vadd.xlane.f32.xlu0 %v838
        %v840 = vpop.xlane.xlu0 %839
        %v841 = vsel %vm495, %v837, 0.0
        %842 = vadd.xlane.f32.xlu0 %v841
        %v843 = vpop.xlane.xlu0 %842
        %v844 = vrcp.pop 32.0
        %v845 = vmul.f32 %v840, %v844
        %v846 = vmul.f32 %v843, %v844
        %v847 = vsub.f32 %v836, %v845
        %v848 = vsub.f32 %v837, %v846
        %v849 = vmul.f32 %v847, %v847
        %v850 = vmul.f32 %v848, %v848
        %v851 = vsel %vm495, %v849, 0.0
        %852 = vadd.xlane.f32.xlu0 %v851
        %v853 = vpop.xlane.xlu0 %852
        %v854 = vsel %vm495, %v850, 0.0
        %855 = vadd.xlane.f32.xlu0 %v854
        %v856 = vpop.xlane.xlu0 %855
        %v857 = vmul.f32 %v853, %v844
        %v858 = vmul.f32 %v856, %v844
        %v859 = vadd.f32 %v857, 1e-05
        %v860 = vadd.f32 %v858, 1e-05
        %v861 = vrsqrt.pop %v859
        %v862 = vrsqrt.pop %v860
        %v863 = vmul.f32 %v847, %v861
        %v864 = vmul.f32 %v848, %v862
        %v865 = vld [vmem:[%s455] sm:$0x1]
        %v867 = vlaneseq
        %v868 = vshrl.u32 %v867, 7
        %v869 = vsub.s32 0, %v868
        %v870 = vrot.slane %v865, %v869
        %v872 = vmul.f32 %v863, %v870
        %v873 = vmul.f32 %v864, %v870
        %v874 = vld [vmem:[%s458] sm:$0x1]
        %v876 = vlaneseq
        %v877 = vshrl.u32 %v876, 7
        %v878 = vsub.s32 0, %v877
        %v879 = vrot.slane %v874, %v878
        %v881 = vadd.f32 %v872, %v879
        %v882 = vadd.f32 %v873, %v879
        %v883 = vcombine.high %v667, 0.0
        %v885 = vunpack.c.l.s4 1983009808
        %v886 = vunpack.c.0.s8 %v885
        %v887 = vlaneseq
        %v888 = vshrl.u32 %v887, 7
        %v889 = vsub.s32 %v886, %v888
        %v890 = vrot.slane %v667, %v889
        %v892 = vunpack.c.l.s4 1983009808
        %v893 = vunpack.c.0.s8 %v892
        %v894 = vlaneseq
        %v895 = vshrl.u32 %v894, 7
        %v896 = vsub.s32 %v893, %v895
        %v897 = vrot.slane %v883, %v896
        %v898 = vcombine.high %v668, 0.0
        %v900 = vunpack.c.l.s4 1983009808
        %v901 = vunpack.c.0.s8 %v900
        %v902 = vlaneseq
        %v903 = vshrl.u32 %v902, 7
        %v904 = vsub.s32 %v901, %v903
        %v905 = vrot.slane %v668, %v904
        %v907 = vunpack.c.l.s4 1983009808
        %v908 = vunpack.c.0.s8 %v907
        %v909 = vlaneseq
        %v910 = vshrl.u32 %v909, 7
        %v911 = vsub.s32 %v908, %v910
        %v912 = vrot.slane %v898, %v911
        %v913 = vcombine.low %v890, %v905
        %v914 = vcombine.high %v890, %v905
        %v916 = vunpack.c.l.s4 1934713408
        %v917 = vunpack.c.0.s8 %v916
        %v918 = vlaneseq
        %v919 = vshrl.u32 %v918, 7
        %v920 = vsub.s32 %v917, %v919
        %v921 = vrot.slane %v913, %v920
        %v923 = vunpack.c.l.s4 1934713408
        %v924 = vunpack.c.0.s8 %v923
        %v925 = vlaneseq
        %v926 = vshrl.u32 %v925, 7
        %v927 = vsub.s32 %v924, %v926
        %v928 = vrot.slane %v914, %v927
        %v929 = vcombine.low %v897, %v912
        %v930 = vcombine.high %v897, %v912
        %v932 = vunpack.c.l.s4 1934713408
        %v933 = vunpack.c.0.s8 %v932
        %v934 = vlaneseq
        %v935 = vshrl.u32 %v934, 7
        %v936 = vsub.s32 %v933, %v935
        %v937 = vrot.slane %v929, %v936
        %v939 = vunpack.c.l.s4 1934713408
        %v940 = vunpack.c.0.s8 %v939
        %v941 = vlaneseq
        %v942 = vshrl.u32 %v941, 7
        %v943 = vsub.s32 %v940, %v942
        %v944 = vrot.slane %v930, %v943
        %v945 = vcombine.high %v921, 0.0
        %v946 = vcombine.high %v928, 0.0
        %v947 = vcombine.high %v937, 0.0
        %v948 = vcombine.high %v944, 0.0
        %950 = vrot.lane.b32.xlu0 %v945, 8
        %v951 = vpop.permute.xlu0 %950
        %954 = vrot.lane.b32.xlu0 %v928, 16
        %v955 = vpop.permute.xlu0 %954
        %958 = vrot.lane.b32.xlu0 %v946, 24
        %v959 = vpop.permute.xlu0 %958
        %962 = vrot.lane.b32.xlu0 %v937, 32
        %v963 = vpop.permute.xlu0 %962
        %966 = vrot.lane.b32.xlu0 %v947, 40
        %v967 = vpop.permute.xlu0 %966
        %970 = vrot.lane.b32.xlu0 %v944, 48
        %v971 = vpop.permute.xlu0 %970
        %974 = vrot.lane.b32.xlu0 %v948, 56
        %v975 = vpop.permute.xlu0 %974
        %v977 = vsel %vm640, %v921, %v951
        %vm978 = vcmask 130048
        %v979 = vsel %vm978, %v977, %v955
        %vm980 = vcmask 195584
        %v981 = vsel %vm980, %v979, %v959
        %v982 = vsel %vm495, %v981, %v963
        %vm983 = vcmask 326656
        %v984 = vsel %vm983, %v982, %v967
        %vm985 = vcmask 392192
        %v986 = vsel %vm985, %v984, %v971
        %vm987 = vcmask 457728
        %v988 = vsel %vm987, %v986, %v975
        %vm989 = vcmask 517120
        %990 = vst.msk [vmem:[%s445] sm:$0x3] %vm989, %v988
        %p991 = scmp.lt.s32.totalorder %s33, 1
        // Predicated region
        $region65: #{tpu_custom_call.1} parent=47 // pred_check
          %p992 = pneg %p991
        $region66: #{tpu_custom_call.1} parent=47 // pred_check_branch
          %994 = sbr.rel (%p992) target = $region68
        $region67: #{tpu_custom_call.1} parent=47 // pred_region
          %995 = vst.msk [vmem:[#allocation2] sm:$0xff] %vm495, %v881
          %996 = vst.msk [vmem:[#allocation2 + $0x8] sm:$0xff] %vm495, %v882
        $region68: #{tpu_custom_call.1} parent=47 // pred_fallthru
          _
        %p997 = scmp.eq.s32.totalorder %s33, 1
        // Predicated region
        $region69: #{tpu_custom_call.1} parent=47 // pred_check
          %p998 = pneg %p997
        $region70: #{tpu_custom_call.1} parent=47 // pred_check_branch
          %1000 = sbr.rel (%p998) target = $region72
        $region71: #{tpu_custom_call.1} parent=47 // pred_region
          %v1001 = vsel %vm495, %v881, 0.0
          %v1002 = vrot.slane %v1001, 4
          %v1003 = vadd.f32 %v1001, %v1002
          %v1004 = vrot.slane %v1003, 2
          %v1005 = vadd.f32 %v1003, %v1004
          %v1006 = vrot.slane %v1005, 1
          %v1007 = vadd.f32 %v1005, %v1006
          %v1008 = vsel %vm495, %v882, 0.0
          %v1009 = vrot.slane %v1008, 4
          %v1010 = vadd.f32 %v1008, %v1009
          %v1011 = vrot.slane %v1010, 2
          %v1012 = vadd.f32 %v1010, %v1011
          %v1013 = vrot.slane %v1012, 1
          %v1014 = vadd.f32 %v1012, %v1013
          %v1015 = vrcp.pop 8.0
          %v1016 = vmul.f32 %v1007, %v1015
          %v1017 = vmul.f32 %v1014, %v1015
          %vm1020 = vcmask 1041409
          %v1021 = vsel %vm1020, %v1017, %v1016
          %vm1023 = vcmask 254976
          %1024 = vst.msk [vmem:[#allocation9] sm:$0x3] %vm1023, %v1021
        $region72: #{tpu_custom_call.1} parent=47 // pred_fallthru
          _
        %s1025 = sand.u32 %s258, 1
        %s1026 = scalar_lea.sflag [#allocation11], %s1025
        %s1027 = sand.u32 %s258, 1
        %s1028 = smul.addr %s1027, 2
        %s1029 = scalar_lea.vmem [#allocation10], %s1028
        // Predicated region
        $region73: #{tpu_custom_call.1} parent=47 // pred_check
          %p1030 = pneg %p240
        $region74: #{tpu_custom_call.1} parent=47 // pred_check_branch
          %1032 = sbr.rel (%p1030) target = $region76
        $region75: #{tpu_custom_call.1} parent=47 // pred_region
          %s1034 = ssub.s32 32, 32
          %1035 = vsyncadd [#allocation5], %s1034
          %s1036 = smul.addr %s32, 32
          %s1037 = scalar_lea.hbm %s7, %s1036
          %s1039 = sshll.u32 [#allocation9], 4
          %s1040 = int_to_ptr.vmem [resolvable:$true] %s1039
          %1042 = dma.vmem_to_hbm [thread:$0]  %s1040, 32, %s1037, [#allocation5]
        $region76: #{tpu_custom_call.1} parent=47 // pred_fallthru
          _
        // Predicated region
        $region77: #{tpu_custom_call.1} parent=47 // pred_check
          %p1043 = pneg %p268
        $region78: #{tpu_custom_call.1} parent=47 // pred_check_branch
          %1045 = sbr.rel (%p1043) target = $region80
        $region79: #{tpu_custom_call.1} parent=47 // pred_region
          %s1047 = ssub.s32 32, 32
          %1048 = vsyncadd %s1026, %s1047
          %s1049 = sadd.s32 %s32, %s33
          %s1050 = smul.addr %s1049, 32
          %s1051 = scalar_lea.hbm %s8, %s1050
          %s1053 = sshll.u32 %s1029, 4
          %s1054 = int_to_ptr.vmem [resolvable:$true] %s1053
          %1056 = dma.vmem_to_hbm [thread:$0]  %s1054, 32, %s1051, %s1026
        $region80: #{tpu_custom_call.1} parent=47 // pred_fallthru
          _
        // Predicated region
        $region81: #{tpu_custom_call.1} parent=47 // pred_check
          %p1057 = pneg %p240
        $region82: #{tpu_custom_call.1} parent=47 // pred_check_branch
          %1059 = sbr.rel (%p1057) target = $region84
        $region83: #{tpu_custom_call.1} parent=47 // pred_region
          %1060 = dma.done [#allocation5], 32
        $region84: #{tpu_custom_call.1} parent=47 // pred_fallthru
          _
      $region48: #{tpu_custom_call.1} parent=5 // pred_fallthru
        _
      %p1061 = scmp.le.s32.totalorder 2, %s23
      // Predicated region
      $region85: #{tpu_custom_call.1} parent=5 // pred_check
        %p1062 = pneg %p1061
      $region86: #{tpu_custom_call.1} parent=5 // pred_check_branch
        %1064 = sbr.rel (%p1062) target = $region88
      $region87: #{tpu_custom_call.1} parent=5 // pred_region
        %s1065 = ssub.s32 %s23, 2
        // Predicated region
        $region89: #{tpu_custom_call.1} parent=87 // pred_check
          %p1066 = pneg %p274
        $region90: #{tpu_custom_call.1} parent=87 // pred_check_branch
          %1068 = sbr.rel (%p1066) target = $region92
        $region91: #{tpu_custom_call.1} parent=87 // pred_region
          %s1069 = sand.u32 %s259, 1
          %s1070 = scalar_lea.sflag [#allocation11], %s1069
          %s1071 = sand.u32 %s259, 1
          %s1072 = smul.addr %s1071, 2
          %s1073 = scalar_lea.vmem [#allocation10], %s1072
          %1074 = dma.done %s1070, 32
        $region92: #{tpu_custom_call.1} parent=87 // pred_fallthru
          _
      $region88: #{tpu_custom_call.1} parent=5 // pred_fallthru
        _
    $region6: #{tpu_custom_call.1} parent=1 // loop_footer
      %s27 = sadd.s32 1, %s23
    $region7: #{tpu_custom_call.1} parent=1 // loop_footer_branch
      %22 = sbr.rel target = $region3
    $region8: #{tpu_custom_call.1} parent=1 // loop_exit
      _
    %1075 = vsyncpa [#allocation4], 1
    %s1076 = scalar_lea.sflag [#allocation4], 1
    %1077 = vsyncpa %s1076, 1
    %1078 = vsyncpa [#allocation7], 1
    %s1079 = scalar_lea.sflag [#allocation7], 1
    %1080 = vsyncpa %s1079, 1
    %1081 = vsyncpa [#allocation5], 1
    %s1082 = scalar_lea.sflag [#allocation5], 1
    %1083 = vsyncpa %s1082, 1
    %1084 = vsyncpa [#allocation11], 1
    %s1085 = scalar_lea.sflag [#allocation11], 1
    %1086 = vsyncpa %s1085, 1

</llo_original>
